<compile_context>
chip_gen: v5e
topology: v5e:2x2
jax: 0.10.0
libtpu: 0.0.40
codegen_flags: <defaults>
</compile_context>

<pallas_src>
import jax
import jax.numpy as jnp
from jax.experimental import pallas as pl
from jax.experimental.pallas import tpu as pltpu


_SMALL_INPUT_ELEMS = 1 << 15   # below this, a fused XLA sin wins on launch overhead


def _siren_kernel(w0_ref, x_ref, o_ref):
    # VPU multiply + EUP sine over the whole VMEM tile (f32 compute).
    w0 = w0_ref[0, 0]
    o_ref[...] = jnp.sin(w0 * x_ref[...].astype(jnp.float32)).astype(o_ref.dtype)


def _round_up(v, m):
    return (v + m - 1) // m * m


def _tpu_generation():
    try:
        kind = jax.devices()[0].device_kind.lower()
    except Exception:
        return 0
    for g in (7, 6, 5, 4):
        if f"v{g}" in kind:
            return g
    return 0


def _gen_block_params():
    """(per-buffer block byte target, safe resident-VMEM budget) per TPU generation."""
    gen = _tpu_generation()
    if gen >= 6:
        # v6e / v7x: 32 MiB default scoped VMEM; 4 MiB blocks -> 16 MiB resident
        # (in + out, double buffered) amortize the ~0.35 us per-grid-step overhead.
        return 4 * 1024 * 1024, 30 * 1024 * 1024
    # v5e / unknown: 16 MiB default scoped VMEM -> keep 2 MiB blocks (8 MiB resident).
    return 2 * 1024 * 1024, 14 * 1024 * 1024


def _choose_blocks(rows, lanes, itemsize, target_bytes, vmem_budget):
    """Pick (block_rows, block_lanes), or None if no legal block fits VMEM."""
    packing = max(8, 32 // max(1, itemsize))          # sublane packing per dtype
    target_elems = max(1, target_bytes // itemsize)

    if lanes % 128 == 0:
        block_lanes = min(lanes, max(128, (target_elems // packing) // 128 * 128))
    else:
        # Mosaic requires the block minor dim to be a multiple of 128 OR the
        # full array dim; non-128 minor dims must be taken whole (layout match).
        block_lanes = lanes

    block_rows = max(packing, (target_elems // block_lanes) // packing * packing)
    block_rows = min(block_rows, _round_up(rows, packing))

    # Ensure >= 2 grid steps when possible so v7x megacore gets both TCs busy.
    if pl.cdiv(rows, block_rows) * pl.cdiv(lanes, block_lanes) < 2:
        if rows >= 2 * packing:
            block_rows = _round_up(pl.cdiv(rows, 2), packing)
        elif lanes % 128 == 0 and lanes >= 256:
            block_lanes = _round_up(pl.cdiv(lanes, 2), 128)

    # Resident VMEM = (in + out) x double buffering.
    while (4 * block_rows * block_lanes * itemsize > vmem_budget
           and block_rows > packing):
        block_rows = max(packing, _round_up(block_rows // 2, packing))
    if 4 * block_rows * block_lanes * itemsize > vmem_budget:
        return None
    return block_rows, block_lanes


def _largest_lane_divisor(n, cap=8192):
    hi = min(n, cap) // 128 * 128
    for cand in range(hi, 0, -128):
        if n % cand == 0:
            return cand
    return None


def _xla_fallback(x, w0, out_dtype, orig_shape):
    y = jnp.sin(jnp.asarray(w0, jnp.float32) * x.astype(jnp.float32))
    return y.astype(out_dtype).reshape(orig_shape)


def siren(x, w0=1.0, *, force_pallas=False):
    """Elementwise sin(w0 * x); matches torch.sin(self.w0 * input)."""
    orig_shape = x.shape
    n = x.size

    # torch.sin promotes integer/bool inputs to floating point.
    if not jnp.issubdtype(x.dtype, jnp.floating):
        x = x.astype(jnp.float32)
    out_dtype = x.dtype
    itemsize = jnp.dtype(out_dtype).itemsize

    # Tiny tensors: launch overhead dominates; a fused XLA op is already optimal.
    if n == 0 or (n < _SMALL_INPUT_ELEMS and not force_pallas):
        return _xla_fallback(x, w0, out_dtype, orig_shape)

    if x.ndim >= 2:
        # Collapse only leading dims (minor dim preserved): layout-preserving,
        # so no relayout copies around the pallas_call.
        lanes = orig_shape[-1]
        rows = n // lanes
        x2d = x.reshape(rows, lanes)
    else:
        # 0-D / 1-D large input: factor into a lane-dense 2-D slab if possible.
        flat = x.reshape(-1)
        lanes = _largest_lane_divisor(n)
        if lanes is None:
            # Ragged 1-D size: one fused XLA pass beats pad+kernel+slice
            # (each extra copy is a full HBM pass for a bandwidth-bound op).
            return _xla_fallback(flat, w0, out_dtype, orig_shape)
        rows = n // lanes
        x2d = flat.reshape(rows, lanes)

    target_bytes, vmem_budget = _gen_block_params()
    blocks = _choose_blocks(rows, lanes, itemsize, target_bytes, vmem_budget)
    if blocks is None:
        # Degenerate shape (huge non-128 minor dim): no legal block fits VMEM.
        return _xla_fallback(x2d, w0, out_dtype, orig_shape)
    block_rows, block_lanes = blocks
    grid = (pl.cdiv(rows, block_rows), pl.cdiv(lanes, block_lanes))

    w0_arr = jnp.asarray(w0, dtype=jnp.float32).reshape(1, 1)

    out2d = pl.pallas_call(
        _siren_kernel,
        out_shape=jax.ShapeDtypeStruct((rows, lanes), out_dtype),
        grid_spec=pltpu.PrefetchScalarGridSpec(
            num_scalar_prefetch=0,
            grid=grid,
            in_specs=[
                pl.BlockSpec(memory_space=pltpu.MemorySpace.SMEM),   # w0 scalar
                pl.BlockSpec((block_rows, block_lanes), lambda i, j: (i, j)),
            ],
            out_specs=pl.BlockSpec((block_rows, block_lanes), lambda i, j: (i, j)),
        ),
        compiler_params=pltpu.CompilerParams(
            dimension_semantics=("parallel", "parallel"),
        ),
        cost_estimate=pl.CostEstimate(
            flops=n, transcendentals=n, bytes_accessed=2 * n * itemsize),
    )(w0_arr, x2d)

    return out2d.reshape(orig_shape)


if __name__ == "__main__":
    key = jax.random.PRNGKey(0)
    k1, k2 = jax.random.split(key)

    # NCHW activation with a non-128 minor dim (exercises the full-minor-dim
    # block path and the 2-step row grid).
    x1 = jax.random.normal(k1, (2, 4, 16, 16), dtype=jnp.float32)
    w0 = 30.0  # Siren commonly uses w0=30; module default is 1.0 — both work.
    y1 = jax.block_until_ready(siren(x1, w0=w0, force_pallas=True))
    ref1 = jnp.sin(w0 * x1)
    assert y1.shape == x1.shape and y1.dtype == x1.dtype
    assert float(jnp.max(jnp.abs(y1 - ref1))) < 1e-5

    # MLP-style activation with a 128-multiple minor dim (lane-dense path).
    x2 = jax.random.normal(k2, (4, 8, 256), dtype=jnp.float32)
    y2 = jax.block_until_ready(siren(x2, w0=1.0, force_pallas=True))
    ref2 = jnp.sin(1.0 * x2)
    assert y2.shape == x2.shape and y2.dtype == x2.dtype
    assert float(jnp.max(jnp.abs(y2 - ref2))) < 1e-5

    print("KERNEL_OK")
</pallas_src>

<mosaic_0001>
module attributes {stable_mosaic.version = 11 : i64} {
  func.func @_siren_kernel(%arg0: i32, %arg1: i32, %arg2: memref<1x1xf32, #tpu.memory_space<smem>>, %arg3: memref<64x16xf32, #tpu.memory_space<vmem>>, %arg4: memref<64x16xf32, #tpu.memory_space<vmem>>) attributes {dimension_semantics = [#tpu.dimension_semantics<parallel>, #tpu.dimension_semantics<parallel>], iteration_bounds = array<i64: 2, 1>, scalar_prefetch = 0 : i64, scratch_operands = 0 : i64, tpu.core_type = #tpu.core_type<tc>, window_params = [{transform_indices = @transform_0, window_bounds = array<i64: 1, 1>}, {transform_indices = @transform_1, window_bounds = array<i64: 64, 16>}, {transform_indices = @transform_2, window_bounds = array<i64: 64, 16>}]} {
    %c0 = arith.constant 0 : index
    %c0_0 = arith.constant 0 : index
    %0 = memref.load %arg2[%c0, %c0_0] : memref<1x1xf32, #tpu.memory_space<smem>>
    %c0_1 = arith.constant 0 : index
    %c0_2 = arith.constant 0 : index
    %1 = vector.load %arg3[%c0_1, %c0_2] : memref<64x16xf32, #tpu.memory_space<vmem>>, vector<64x16xf32>
    %2 = vector.broadcast %0 : f32 to vector<64x16xf32>
    %3 = arith.mulf %2, %1 : vector<64x16xf32>
    %4 = math.sin %3 : vector<64x16xf32>
    %c0_3 = arith.constant 0 : index
    %c0_4 = arith.constant 0 : index
    %5 = vector.load %arg4[%c0_3, %c0_4] : memref<64x16xf32, #tpu.memory_space<vmem>>, vector<64x16xf32>
    tpu.vector_store %arg4[%c0_3, %c0_4], %4 {strides = array<i32>} : memref<64x16xf32, #tpu.memory_space<vmem>>, vector<64x16xf32>,
    return
  }
  func.func @transform_0(%arg0: i32, %arg1: i32) -> (i32, i32) {
    %c0_i32 = arith.constant 0 : i32
    %c0_i32_0 = arith.constant 0 : i32
    %c0_i32_1 = arith.constant 0 : i32
    return %c0_i32, %c0_i32_0 : i32, i32
  }
  func.func @transform_1(%arg0: i32, %arg1: i32) -> (i32, i32) {
    %c0_i32 = arith.constant 0 : i32
    return %arg0, %arg1 : i32, i32
  }
  func.func @transform_2(%arg0: i32, %arg1: i32) -> (i32, i32) {
    %c0_i32 = arith.constant 0 : i32
    return %arg0, %arg1 : i32, i32
  }
}

</mosaic_0001>

<llo_original>
// kernel: tpu_custom_call.1
$region0: #{tpu_custom_call.1}
  #allocation0 [shape = 'u32[]', space=smem, size = 0x4, offset = 0x4, fixed_abs, tag = 'smem constant byte address 0x4 - core index']
  #allocation1 [shape = 'u32[72,128]{1,0:T(1,128)}', space=vmem, size = 0x9000, scoped, tag = 'internal scratch']
  #allocation2 [shape = 'f32[1,1]{1,0:T(1,128)S(6)}', space=smem, size = 0x200, scoped, tag = 'scoped memory for tpu_custom_call.1']
  %s0 = inlined_call_operand.<no memory space> [shape: f32[1,1], index: 0, kind: input, shape index: {}]
  %s1 = inlined_call_operand.vmem [shape: f32[128,16], index: 1, kind: input, shape index: {}]
  %s2 = inlined_call_operand.vmem [shape: f32[128,16], index: 2, kind: output, shape index: {}]
  %s3 = sld [smem:[#allocation0]]
  $region41: #{tpu_custom_call.1} parent=0
    _
  %s5 = ssub.s32 1, %s3
  %s6 = scalar_select 0, %s5, %s3
  %7 = sst [smem:[#allocation2]] %s0
  loop: start=0, step=1, limit=4
  $region2: #{tpu_custom_call.1} parent=0 // loop_pre_header
    _
  $region3: #{tpu_custom_call.1} parent=0 // loop_header
    %s9 = sphi 0, %s13
    %p10 = scmp.ge.s32.totalorder %s9, 4
    %s16 = sphi 0, %s28
    %s17 = sphi 0, %s24
    %s18 = sphi 0, %s16
    %s19 = sphi 0, %s17
    %s20 = sphi 0, %s18
    %s21 = sphi 0, %s19
    %s29 = sphi 0, %s29
    %s31 = sphi 0, %s29
    %s32 = sphi 0, %s31
    %s46 = sphi 0, %s32
    %s54 = sphi 0, %s56
    %s57 = sphi 0, %s54
    %s58 = sphi 0, %s57
    %s74 = sphi 0, %s58
    %s82 = sphi 0, %s84
    %s85 = sphi 0, %s82
    %s86 = sphi 0, %s85
    %s102 = sphi 0, %s86
  $region4: #{tpu_custom_call.1} parent=0 // loop_header_branch
    %12 = sbr.rel (%p10) target = $region8
  $region5: #{tpu_custom_call.1} parent=0 // loop_body
    %s14 = ssub.s32 %s9, 1
    %s15 = ssub.s32 %s9, 2
    %s22 = sadd.s32 1, %s17
    %p23 = scmp.ge.s32.totalorder %s22, 1
    %s24 = scalar_select %p23, 0, %s22
    %s25 = sadd.s32 1, %s16
    %s26 = scalar_select %p23, %s25, %s16
    %p27 = scmp.ge.s32.totalorder %s26, 2
    %s28 = scalar_select %p27, 0, %s26
    %s30 = sadd.s32 %s29, 1
    %p33 = scmp.eq.s32.totalorder %s9, 1
    %p34 = scmp.ne.s32.totalorder %s29, %s31
    %p35 = scmp.eq.s32.totalorder %s9, 0
    %p36 = por %p34, %p35
    %p37 = scmp.ne.s32.totalorder %s29, %s31
    %p38 = scmp.eq.s32.totalorder %s14, 1
    %p39 = por %p37, %p38
    %p40 = scmp.ne.s32.totalorder %s31, %s32
    %p41 = scmp.eq.s32.totalorder %s14, 0
    %p42 = por %p40, %p41
    %p43 = scmp.ne.s32.totalorder %s31, %s32
    %p44 = scmp.eq.s32.totalorder %s15, 1
    %p45 = por %p43, %p44
    %p47 = scmp.ne.s32.totalorder %s32, %s46
    %p48 = scmp.eq.s32.totalorder %s15, 0
    %p49 = por %p47, %p48
    %s50 = ssub.s32 %s16, %s28
    %s51 = ssub.s32 %s17, %s24
    %s52 = sor.u32 %s50, %s51
    %p53 = scmp.eq.s32.totalorder %s52, 0
    %s55 = sadd.s32 %s54, 1
    %s56 = scalar_select %p53, %s54, %s55
    %p59 = pneg %p53
    %p60 = scmp.eq.s32.totalorder %s9, 1
    %p61 = por %p59, %p60
    %p62 = scmp.ne.s32.totalorder %s54, %s57
    %p63 = scmp.eq.s32.totalorder %s9, 0
    %p64 = por %p62, %p63
    %p65 = scmp.ne.s32.totalorder %s54, %s57
    %p66 = scmp.eq.s32.totalorder %s14, 1
    %p67 = por %p65, %p66
    %p68 = scmp.ne.s32.totalorder %s57, %s58
    %p69 = scmp.eq.s32.totalorder %s14, 0
    %p70 = por %p68, %p69
    %p71 = scmp.ne.s32.totalorder %s57, %s58
    %p72 = scmp.eq.s32.totalorder %s15, 1
    %p73 = por %p71, %p72
    %p75 = scmp.ne.s32.totalorder %s58, %s74
    %p76 = scmp.eq.s32.totalorder %s15, 0
    %p77 = por %p75, %p76
    %s78 = ssub.s32 %s16, %s28
    %s79 = ssub.s32 %s17, %s24
    %s80 = sor.u32 %s78, %s79
    %p81 = scmp.eq.s32.totalorder %s80, 0
    %s83 = sadd.s32 %s82, 1
    %s84 = scalar_select %p81, %s82, %s83
    %p87 = pneg %p81
    %p88 = scmp.eq.s32.totalorder %s9, 1
    %p89 = por %p87, %p88
    %p90 = scmp.ne.s32.totalorder %s82, %s85
    %p91 = scmp.eq.s32.totalorder %s9, 0
    %p92 = por %p90, %p91
    %p93 = scmp.ne.s32.totalorder %s82, %s85
    %p94 = scmp.eq.s32.totalorder %s14, 1
    %p95 = por %p93, %p94
    %p96 = scmp.ne.s32.totalorder %s85, %s86
    %p97 = scmp.eq.s32.totalorder %s14, 0
    %p98 = por %p96, %p97
    %p99 = scmp.ne.s32.totalorder %s85, %s86
    %p100 = scmp.eq.s32.totalorder %s15, 1
    %p101 = por %p99, %p100
    %p103 = scmp.ne.s32.totalorder %s86, %s102
    %p104 = scmp.eq.s32.totalorder %s15, 0
    %p105 = por %p103, %p104
    %p106 = scmp.le.s32.totalorder 1, %s9
    %p107 = scmp.lt.s32.totalorder %s9, 3
    %p108 = pnand %p106, %p107
    %p109 = pneg %p108
    // Predicated region
    $region9: #{tpu_custom_call.1} parent=5 // pred_check
      _
    $region10: #{tpu_custom_call.1} parent=5 // pred_check_branch
      %111 = sbr.rel (%p108) target = $region12
    $region11: #{tpu_custom_call.1} parent=5 // pred_region
      %s112 = ssub.s32 %s9, 1
      // Predicated region
      $region13: #{tpu_custom_call.1} parent=11 // pred_check
        %p113 = pneg %p42
      $region14: #{tpu_custom_call.1} parent=11 // pred_check_branch
        %115 = sbr.rel (%p113) target = $region16
      $region15: #{tpu_custom_call.1} parent=11 // pred_region
        _
      $region16: #{tpu_custom_call.1} parent=11 // pred_fallthru
        _
    $region12: #{tpu_custom_call.1} parent=5 // pred_fallthru
      _
    %p116 = scmp.lt.s32.totalorder %s9, 2
    // Predicated region
    $region17: #{tpu_custom_call.1} parent=5 // pred_check
      %p117 = pneg %p116
    $region18: #{tpu_custom_call.1} parent=5 // pred_check_branch
      %119 = sbr.rel (%p117) target = $region20
    $region19: #{tpu_custom_call.1} parent=5 // pred_region
      // Predicated region
      $region21: #{tpu_custom_call.1} parent=19 // pred_check
        %p120 = pneg %p64
      $region22: #{tpu_custom_call.1} parent=19 // pred_check_branch
        %122 = sbr.rel (%p120) target = $region24
      $region23: #{tpu_custom_call.1} parent=19 // pred_region
        %s123 = smul.u32 8, %s16
        %p124 = scmp.lt.s32.totalorder %s123, 15
        %s125 = scalar_select %p124, %s123, 15
        %p126 = scmp.lt.s32.totalorder %s17, 0
        %s127 = scalar_select %p126, %s17, 0
        %s128 = sadd.s32 %s127, %s125
        %s129 = smul.addr %s128, 8
        %s130 = scalar_lea.vmem %s1, %s129
        %s131 = smul.u32 8, %s16
      $region24: #{tpu_custom_call.1} parent=19 // pred_fallthru
        _
    $region20: #{tpu_custom_call.1} parent=5 // pred_fallthru
      _
    %p132 = scmp.le.s32.totalorder 1, %s9
    %p133 = scmp.lt.s32.totalorder %s9, 3
    %p134 = pnand %p132, %p133
    %p135 = pneg %p134
    // Predicated region
    $region25: #{tpu_custom_call.1} parent=5 // pred_check
      _
    $region26: #{tpu_custom_call.1} parent=5 // pred_check_branch
      %137 = sbr.rel (%p134) target = $region28
    $region27: #{tpu_custom_call.1} parent=5 // pred_region
      %s138 = ssub.s32 %s9, 1
      %p139 = pneg %p42
      %p140 = pneg %p39
      %s141 = smul.u32 8, %s18
      %p142 = scmp.lt.s32.totalorder %s141, 15
      %s143 = scalar_select %p142, %s141, 15
      %p144 = scmp.lt.s32.totalorder %s19, 0
      %s145 = scalar_select %p144, %s19, 0
      %s146 = sadd.s32 %s145, %s143
      %s147 = smul.addr %s146, 8
      %s148 = scalar_lea.vmem %s1, %s147
      %p149 = pneg %p70
      %p150 = pneg %p67
      %p151 = pneg %p98
      %p152 = pneg %p95
      %s153 = smul.u32 8, %s18
      %p154 = scmp.lt.s32.totalorder %s153, 15
      %s155 = scalar_select %p154, %s153, 15
      %p156 = scmp.lt.s32.totalorder %s19, 0
      %s157 = scalar_select %p156, %s19, 0
      %s158 = sadd.s32 %s157, %s155
      %s159 = smul.addr %s158, 8
      %s160 = scalar_lea.vmem %s2, %s159
      %s161 = smul.u32 8, %s18
      %p162 = scmp.lt.s32.totalorder %s161, 15
      %s163 = scalar_select %p162, %s161, 15
      %p164 = scmp.lt.s32.totalorder %s19, 0
      %s165 = scalar_select %p164, %s19, 0
      %s166 = sadd.s32 %s165, %s163
      %s167 = smul.addr %s166, 8
      %s168 = scalar_lea.vmem %s1, %s167
      %s169 = smul.u32 8, %s18
      %s170 = smul.u32 8, %s18
      %p171 = scmp.lt.s32.totalorder %s170, 15
      %s172 = scalar_select %p171, %s170, 15
      %p173 = scmp.lt.s32.totalorder %s19, 0
      %s174 = scalar_select %p173, %s19, 0
      %s175 = sadd.s32 %s174, %s172
      %s176 = smul.addr %s175, 8
      %s177 = scalar_lea.vmem %s2, %s176
      %s178 = smul.u32 8, %s18
      %s179 = sld [smem:[#allocation2]]
      %v180 = vld [vmem:[%s168] sm:$0xff]
      %v181 = vld [vmem:[%s168 + $0x8] sm:$0xff]
      %v182 = vld [vmem:[%s168 + $0x10] sm:$0xff]
      %v183 = vld [vmem:[%s168 + $0x18] sm:$0xff]
      %v184 = vld [vmem:[%s168 + $0x20] sm:$0xff]
      %v185 = vld [vmem:[%s168 + $0x28] sm:$0xff]
      %v186 = vld [vmem:[%s168 + $0x30] sm:$0xff]
      %v187 = vld [vmem:[%s168 + $0x38] sm:$0xff]
      %v188 = vstv %s179
      %v189 = vmul.f32 %v188, %v180
      %v190 = vmul.f32 %v188, %v181
      %v191 = vmul.f32 %v188, %v182
      %v192 = vmul.f32 %v188, %v183
      %v193 = vmul.f32 %v188, %v184
      %v194 = vmul.f32 %v188, %v185
      %v195 = vmul.f32 %v188, %v186
      %v196 = vmul.f32 %v188, %v187
      %v197 = vand.u32 2147483647, %v189
      %vm198 = vcmp.le.f32.partialorder %v197, 0.7853982
      %vm199 = vcmp.lt.s32.totalorder %v189, 0
      %v200 = vand.u32 %v189, 2139095040
      %v201 = vshrl.u32 %v200, 23
      %v202 = vsub.s32 %v201, 127
      %v203 = vand.u32 2147483647, %v189
      %v204 = vand.u32 %v203, 8388607
      %v205 = vor.u32 %v204, 8388608
      %v206 = vsub.s32 0, %v205
      %v207 = vadd.s32 %v202, 1
      %vm208 = vcmp.gt.s32.totalorder %v207, 0
      %v209 = vsel %vm208, %v207, 0
      %v210 = vshrl.u32 %v209, 5
      %v211 = vand.u32 %v209, 31
      %v212 = vsub.s32 32, %v211
      %v213 = vshrl.u32 683565275, %v212
      %v214 = vshll.u32 683565275, %v211
      %v215 = vshrl.u32 2475754826, %v212
      %v216 = vor.u32 %v214, %v215
      %v217 = vshll.u32 2475754826, %v211
      %v218 = vshrl.u32 2131351028, %v212
      %v219 = vor.u32 %v217, %v218
      %v220 = vshll.u32 2131351028, %v211
      %v221 = vshrl.u32 2102212464, %v212
      %v222 = vor.u32 %v220, %v221
      %v223 = vshll.u32 2102212464, %v211
      %v224 = vshrl.u32 920167782, %v212
      %v225 = vor.u32 %v223, %v224
      %v226 = vshll.u32 920167782, %v211
      %v227 = vshrl.u32 1326507024, %v212
      %v228 = vor.u32 %v226, %v227
      %vm229 = vcmp.lt.s32.totalorder %v210, 1
      %vm230 = vcmp.lt.s32.totalorder %v210, 2
      %vm231 = vcmp.lt.s32.totalorder %v210, 3
      %vm232 = vcmp.lt.s32.totalorder %v210, 4
      %v233 = vsel %vm229, %v213, %v216
      %v234 = vsel %vm232, %v222, 2102212464
      %v235 = vsel %vm231, %v219, %v234
      %v236 = vsel %vm230, %v233, %v235
      %v237 = vsel %vm229, %v216, %v219
      %v238 = vsel %vm232, %v225, 920167782
      %v239 = vsel %vm231, %v222, %v238
      %v240 = vsel %vm230, %v237, %v239
      %v241 = vsel %vm229, %v219, %v222
      %v242 = vsel %vm232, %v228, 1326507024
      %v243 = vsel %vm231, %v225, %v242
      %v244 = vsel %vm230, %v241, %v243
      %v245 = vshll.u32 %v205, 8
      %v246 = vand.u32 %v245, 65535
      %v247 = vshrl.u32 %v245, 16
      %v248 = vand.u32 %v244, 65535
      %v249 = vshrl.u32 %v244, 16
      %v250 = vmul.u32 %v246, %v248
      %v251 = vmul.u32 %v246, %v249
      %v252 = vmul.u32 %v247, %v248
      %v253 = vmul.u32 %v247, %v249
      %v254 = vshll.u32 %v251, 16
      %v255 = vshrl.u32 %v251, 16
      %v256 = vshll.u32 %v252, 16
      %v257 = vshrl.u32 %v252, 16
      %vm258 = vc.u32 %v250, %v254
      %v259 = vsel %vm258, 1, 0
      %v260 = vadd.s32 %v250, %v254
      %v261 = vadd.s32 %v253, %v259
      %vm262 = vc.u32 %v260, %v256
      %v263 = vsel %vm262, 1, 0
      %v264 = vadd.s32 %v260, %v256
      %v265 = vadd.s32 %v261, %v263
      %v266 = vadd.s32 %v265, %v255
      %v267 = vadd.s32 %v266, %v257
      %v268 = vand.u32 %v245, 65535
      %v269 = vshrl.u32 %v245, 16
      %v270 = vand.u32 %v240, 65535
      %v271 = vshrl.u32 %v240, 16
      %v272 = vmul.u32 %v268, %v270
      %v273 = vmul.u32 %v268, %v271
      %v274 = vmul.u32 %v269, %v270
      %v275 = vmul.u32 %v269, %v271
      %v276 = vshll.u32 %v273, 16
      %v277 = vshrl.u32 %v273, 16
      %v278 = vshll.u32 %v274, 16
      %v279 = vshrl.u32 %v274, 16
      %vm280 = vc.u32 %v272, %v276
      %v281 = vsel %vm280, 1, 0
      %v282 = vadd.s32 %v272, %v276
      %v283 = vadd.s32 %v275, %v281
      %vm284 = vc.u32 %v282, %v278
      %v285 = vsel %vm284, 1, 0
      %v286 = vadd.s32 %v282, %v278
      %v287 = vadd.s32 %v283, %v285
      %v288 = vadd.s32 %v287, %v277
      %v289 = vadd.s32 %v288, %v279
      %v290 = vmul.u32 %v245, %v236
      %v291 = vadd.s32 %v267, %v286
      %vm292 = vc.u32 %v267, %v286
      %v293 = vadd.s32 %v289, 1
      %v294 = vsel %vm292, %v293, %v289
      %v295 = vadd.s32 %v290, %v294
      %v296 = vadd.s32 %v295, 536870912
      %v297 = vshrl.u32 %v296, 30
      %v298 = vshll.u32 %v297, 30
      %v299 = vsub.s32 %v295, %v298
      %vm300 = vcmp.lt.s32.totalorder %v299, 0
      %v301 = vsub.s32 0, %v299
      %v302 = vsel %vm300, %v301, %v299
      %v303 = vclz %v302
      %v304 = vsub.s32 %v303, 2
      %vm305 = vcmp.gt.s32.totalorder 0, %v304
      %v306 = vsel %vm305, 0, %v304
      %v307 = vsub.s32 32, %v306
      %v308 = vshll.u32 %v299, %v306
      %v309 = vshrl.u32 %v291, %v307
      %v310 = vor.u32 %v308, %v309
      %v311 = vsub.s32 4294967266, %v306
      %v312 = vadd.s32 %v311, 127
      %v313 = vshll.u32 %v312, 23
      %v314 = vor.u32 4788187, %v313
      %v315 = vand.u32 2147483647, %v314
      %v317 = vcvt.s32.f32 %v310
      %v318 = vmul.f32 %v317, %v315
      %v319 = vxor.u32 %v318, 2147483648
      %v320 = vsel %vm199, %v319, %v318
      %v321 = vsub.s32 4, %v297
      %v322 = vsel %vm199, %v321, %v297
      %v323 = vsel %vm198, %v189, %v320
      %v324 = vsel %vm198, 0, %v322
      %v325 = vmul.f32 %v323, %v323
      %v326 = vmul.f32 %v325, -0.001358992
      %v327 = vadd.f32 %v326, 0.041655596
      %v328 = vmul.f32 %v325, %v327
      %v329 = vadd.f32 %v328, -0.4999988
      %v330 = vmul.f32 %v325, %v329
      %v331 = vadd.f32 1.0, %v330
      %v332 = vmul.f32 %v323, %v323
      %v333 = vmul.f32 %v332, -0.00019511016
      %v334 = vadd.f32 %v333, 0.008332121
      %v335 = vmul.f32 %v332, %v334
      %v336 = vadd.f32 %v335, -0.16666654
      %v337 = vmul.f32 %v332, %v336
      %v338 = vadd.f32 %v337, 1.0
      %v339 = vmul.f32 %v338, %v323
      %vm340 = vweird.f32 %v189
      %v341 = vadd.s32 %v324, 3
      %v342 = vand.u32 %v341, 3
      %vm343 = vcmp.lt.s32.totalorder %v342, 2
      %vm344 = vcmp.eq.s32.totalorder %v342, 0
      %v345 = vxor.u32 %v339, 2147483648
      %v346 = vsel %vm344, %v331, %v345
      %vm347 = vcmp.eq.s32.totalorder %v342, 2
      %v348 = vxor.u32 %v331, 2147483648
      %v349 = vsel %vm347, %v348, %v339
      %v350 = vsel %vm343, %v346, %v349
      %v351 = vsel %vm340, nan, %v350
      %v352 = vand.u32 2147483647, %v190
      %vm353 = vcmp.le.f32.partialorder %v352, 0.7853982
      %vm354 = vcmp.lt.s32.totalorder %v190, 0
      %v355 = vand.u32 %v190, 2139095040
      %v356 = vshrl.u32 %v355, 23
      %v357 = vsub.s32 %v356, 127
      %v358 = vand.u32 2147483647, %v190
      %v359 = vand.u32 %v358, 8388607
      %v360 = vor.u32 %v359, 8388608
      %v361 = vsub.s32 0, %v360
      %v362 = vadd.s32 %v357, 1
      %vm363 = vcmp.gt.s32.totalorder %v362, 0
      %v364 = vsel %vm363, %v362, 0
      %v365 = vshrl.u32 %v364, 5
      %v366 = vand.u32 %v364, 31
      %v367 = vsub.s32 32, %v366
      %v368 = vshrl.u32 683565275, %v367
      %v369 = vshll.u32 683565275, %v366
      %v370 = vshrl.u32 2475754826, %v367
      %v371 = vor.u32 %v369, %v370
      %v372 = vshll.u32 2475754826, %v366
      %v373 = vshrl.u32 2131351028, %v367
      %v374 = vor.u32 %v372, %v373
      %v375 = vshll.u32 2131351028, %v366
      %v376 = vshrl.u32 2102212464, %v367
      %v377 = vor.u32 %v375, %v376
      %v378 = vshll.u32 2102212464, %v366
      %v379 = vshrl.u32 920167782, %v367
      %v380 = vor.u32 %v378, %v379
      %v381 = vshll.u32 920167782, %v366
      %v382 = vshrl.u32 1326507024, %v367
      %v383 = vor.u32 %v381, %v382
      %vm384 = vcmp.lt.s32.totalorder %v365, 1
      %vm385 = vcmp.lt.s32.totalorder %v365, 2
      %vm386 = vcmp.lt.s32.totalorder %v365, 3
      %vm387 = vcmp.lt.s32.totalorder %v365, 4
      %v388 = vsel %vm384, %v368, %v371
      %v389 = vsel %vm387, %v377, 2102212464
      %v390 = vsel %vm386, %v374, %v389
      %v391 = vsel %vm385, %v388, %v390
      %v392 = vsel %vm384, %v371, %v374
      %v393 = vsel %vm387, %v380, 920167782
      %v394 = vsel %vm386, %v377, %v393
      %v395 = vsel %vm385, %v392, %v394
      %v396 = vsel %vm384, %v374, %v377
      %v397 = vsel %vm387, %v383, 1326507024
      %v398 = vsel %vm386, %v380, %v397
      %v399 = vsel %vm385, %v396, %v398
      %v400 = vshll.u32 %v360, 8
      %v401 = vand.u32 %v400, 65535
      %v402 = vshrl.u32 %v400, 16
      %v403 = vand.u32 %v399, 65535
      %v404 = vshrl.u32 %v399, 16
      %v405 = vmul.u32 %v401, %v403
      %v406 = vmul.u32 %v401, %v404
      %v407 = vmul.u32 %v402, %v403
      %v408 = vmul.u32 %v402, %v404
      %v409 = vshll.u32 %v406, 16
      %v410 = vshrl.u32 %v406, 16
      %v411 = vshll.u32 %v407, 16
      %v412 = vshrl.u32 %v407, 16
      %vm413 = vc.u32 %v405, %v409
      %v414 = vsel %vm413, 1, 0
      %v415 = vadd.s32 %v405, %v409
      %v416 = vadd.s32 %v408, %v414
      %vm417 = vc.u32 %v415, %v411
      %v418 = vsel %vm417, 1, 0
      %v419 = vadd.s32 %v415, %v411
      %v420 = vadd.s32 %v416, %v418
      %v421 = vadd.s32 %v420, %v410
      %v422 = vadd.s32 %v421, %v412
      %v423 = vand.u32 %v400, 65535
      %v424 = vshrl.u32 %v400, 16
      %v425 = vand.u32 %v395, 65535
      %v426 = vshrl.u32 %v395, 16
      %v427 = vmul.u32 %v423, %v425
      %v428 = vmul.u32 %v423, %v426
      %v429 = vmul.u32 %v424, %v425
      %v430 = vmul.u32 %v424, %v426
      %v431 = vshll.u32 %v428, 16
      %v432 = vshrl.u32 %v428, 16
      %v433 = vshll.u32 %v429, 16
      %v434 = vshrl.u32 %v429, 16
      %vm435 = vc.u32 %v427, %v431
      %v436 = vsel %vm435, 1, 0
      %v437 = vadd.s32 %v427, %v431
      %v438 = vadd.s32 %v430, %v436
      %vm439 = vc.u32 %v437, %v433
      %v440 = vsel %vm439, 1, 0
      %v441 = vadd.s32 %v437, %v433
      %v442 = vadd.s32 %v438, %v440
      %v443 = vadd.s32 %v442, %v432
      %v444 = vadd.s32 %v443, %v434
      %v445 = vmul.u32 %v400, %v391
      %v446 = vadd.s32 %v422, %v441
      %vm447 = vc.u32 %v422, %v441
      %v448 = vadd.s32 %v444, 1
      %v449 = vsel %vm447, %v448, %v444
      %v450 = vadd.s32 %v445, %v449
      %v451 = vadd.s32 %v450, 536870912
      %v452 = vshrl.u32 %v451, 30
      %v453 = vshll.u32 %v452, 30
      %v454 = vsub.s32 %v450, %v453
      %vm455 = vcmp.lt.s32.totalorder %v454, 0
      %v456 = vsub.s32 0, %v454
      %v457 = vsel %vm455, %v456, %v454
      %v458 = vclz %v457
      %v459 = vsub.s32 %v458, 2
      %vm460 = vcmp.gt.s32.totalorder 0, %v459
      %v461 = vsel %vm460, 0, %v459
      %v462 = vsub.s32 32, %v461
      %v463 = vshll.u32 %v454, %v461
      %v464 = vshrl.u32 %v446, %v462
      %v465 = vor.u32 %v463, %v464
      %v466 = vsub.s32 4294967266, %v461
      %v467 = vadd.s32 %v466, 127
      %v468 = vshll.u32 %v467, 23
      %v469 = vor.u32 4788187, %v468
      %v470 = vand.u32 2147483647, %v469
      %v472 = vcvt.s32.f32 %v465
      %v473 = vmul.f32 %v472, %v470
      %v474 = vxor.u32 %v473, 2147483648
      %v475 = vsel %vm354, %v474, %v473
      %v476 = vsub.s32 4, %v452
      %v477 = vsel %vm354, %v476, %v452
      %v478 = vsel %vm353, %v190, %v475
      %v479 = vsel %vm353, 0, %v477
      %v480 = vmul.f32 %v478, %v478
      %v481 = vmul.f32 %v480, -0.001358992
      %v482 = vadd.f32 %v481, 0.041655596
      %v483 = vmul.f32 %v480, %v482
      %v484 = vadd.f32 %v483, -0.4999988
      %v485 = vmul.f32 %v480, %v484
      %v486 = vadd.f32 1.0, %v485
      %v487 = vmul.f32 %v478, %v478
      %v488 = vmul.f32 %v487, -0.00019511016
      %v489 = vadd.f32 %v488, 0.008332121
      %v490 = vmul.f32 %v487, %v489
      %v491 = vadd.f32 %v490, -0.16666654
      %v492 = vmul.f32 %v487, %v491
      %v493 = vadd.f32 %v492, 1.0
      %v494 = vmul.f32 %v493, %v478
      %vm495 = vweird.f32 %v190
      %v496 = vadd.s32 %v479, 3
      %v497 = vand.u32 %v496, 3
      %vm498 = vcmp.lt.s32.totalorder %v497, 2
      %vm499 = vcmp.eq.s32.totalorder %v497, 0
      %v500 = vxor.u32 %v494, 2147483648
      %v501 = vsel %vm499, %v486, %v500
      %vm502 = vcmp.eq.s32.totalorder %v497, 2
      %v503 = vxor.u32 %v486, 2147483648
      %v504 = vsel %vm502, %v503, %v494
      %v505 = vsel %vm498, %v501, %v504
      %v506 = vsel %vm495, nan, %v505
      %v507 = vand.u32 2147483647, %v191
      %vm508 = vcmp.le.f32.partialorder %v507, 0.7853982
      %vm509 = vcmp.lt.s32.totalorder %v191, 0
      %v510 = vand.u32 %v191, 2139095040
      %v511 = vshrl.u32 %v510, 23
      %v512 = vsub.s32 %v511, 127
      %v513 = vand.u32 2147483647, %v191
      %v514 = vand.u32 %v513, 8388607
      %v515 = vor.u32 %v514, 8388608
      %v516 = vsub.s32 0, %v515
      %v517 = vadd.s32 %v512, 1
      %vm518 = vcmp.gt.s32.totalorder %v517, 0
      %v519 = vsel %vm518, %v517, 0
      %v520 = vshrl.u32 %v519, 5
      %v521 = vand.u32 %v519, 31
      %v522 = vsub.s32 32, %v521
      %v523 = vshrl.u32 683565275, %v522
      %v524 = vshll.u32 683565275, %v521
      %v525 = vshrl.u32 2475754826, %v522
      %v526 = vor.u32 %v524, %v525
      %v527 = vshll.u32 2475754826, %v521
      %v528 = vshrl.u32 2131351028, %v522
      %v529 = vor.u32 %v527, %v528
      %v530 = vshll.u32 2131351028, %v521
      %v531 = vshrl.u32 2102212464, %v522
      %v532 = vor.u32 %v530, %v531
      %v533 = vshll.u32 2102212464, %v521
      %v534 = vshrl.u32 920167782, %v522
      %v535 = vor.u32 %v533, %v534
      %v536 = vshll.u32 920167782, %v521
      %v537 = vshrl.u32 1326507024, %v522
      %v538 = vor.u32 %v536, %v537
      %vm539 = vcmp.lt.s32.totalorder %v520, 1
      %vm540 = vcmp.lt.s32.totalorder %v520, 2
      %vm541 = vcmp.lt.s32.totalorder %v520, 3
      %vm542 = vcmp.lt.s32.totalorder %v520, 4
      %v543 = vsel %vm539, %v523, %v526
      %v544 = vsel %vm542, %v532, 2102212464
      %v545 = vsel %vm541, %v529, %v544
      %v546 = vsel %vm540, %v543, %v545
      %v547 = vsel %vm539, %v526, %v529
      %v548 = vsel %vm542, %v535, 920167782
      %v549 = vsel %vm541, %v532, %v548
      %v550 = vsel %vm540, %v547, %v549
      %v551 = vsel %vm539, %v529, %v532
      %v552 = vsel %vm542, %v538, 1326507024
      %v553 = vsel %vm541, %v535, %v552
      %v554 = vsel %vm540, %v551, %v553
      %v555 = vshll.u32 %v515, 8
      %v556 = vand.u32 %v555, 65535
      %v557 = vshrl.u32 %v555, 16
      %v558 = vand.u32 %v554, 65535
      %v559 = vshrl.u32 %v554, 16
      %v560 = vmul.u32 %v556, %v558
      %v561 = vmul.u32 %v556, %v559
      %v562 = vmul.u32 %v557, %v558
      %v563 = vmul.u32 %v557, %v559
      %v564 = vshll.u32 %v561, 16
      %v565 = vshrl.u32 %v561, 16
      %v566 = vshll.u32 %v562, 16
      %v567 = vshrl.u32 %v562, 16
      %vm568 = vc.u32 %v560, %v564
      %v569 = vsel %vm568, 1, 0
      %v570 = vadd.s32 %v560, %v564
      %v571 = vadd.s32 %v563, %v569
      %vm572 = vc.u32 %v570, %v566
      %v573 = vsel %vm572, 1, 0
      %v574 = vadd.s32 %v570, %v566
      %v575 = vadd.s32 %v571, %v573
      %v576 = vadd.s32 %v575, %v565
      %v577 = vadd.s32 %v576, %v567
      %v578 = vand.u32 %v555, 65535
      %v579 = vshrl.u32 %v555, 16
      %v580 = vand.u32 %v550, 65535
      %v581 = vshrl.u32 %v550, 16
      %v582 = vmul.u32 %v578, %v580
      %v583 = vmul.u32 %v578, %v581
      %v584 = vmul.u32 %v579, %v580
      %v585 = vmul.u32 %v579, %v581
      %v586 = vshll.u32 %v583, 16
      %v587 = vshrl.u32 %v583, 16
      %v588 = vshll.u32 %v584, 16
      %v589 = vshrl.u32 %v584, 16
      %vm590 = vc.u32 %v582, %v586
      %v591 = vsel %vm590, 1, 0
      %v592 = vadd.s32 %v582, %v586
      %v593 = vadd.s32 %v585, %v591
      %vm594 = vc.u32 %v592, %v588
      %v595 = vsel %vm594, 1, 0
      %v596 = vadd.s32 %v592, %v588
      %v597 = vadd.s32 %v593, %v595
      %v598 = vadd.s32 %v597, %v587
      %v599 = vadd.s32 %v598, %v589
      %v600 = vmul.u32 %v555, %v546
      %v601 = vadd.s32 %v577, %v596
      %vm602 = vc.u32 %v577, %v596
      %v603 = vadd.s32 %v599, 1
      %v604 = vsel %vm602, %v603, %v599
      %v605 = vadd.s32 %v600, %v604
      %v606 = vadd.s32 %v605, 536870912
      %v607 = vshrl.u32 %v606, 30
      %v608 = vshll.u32 %v607, 30
      %v609 = vsub.s32 %v605, %v608
      %vm610 = vcmp.lt.s32.totalorder %v609, 0
      %v611 = vsub.s32 0, %v609
      %v612 = vsel %vm610, %v611, %v609
      %v613 = vclz %v612
      %v614 = vsub.s32 %v613, 2
      %vm615 = vcmp.gt.s32.totalorder 0, %v614
      %v616 = vsel %vm615, 0, %v614
      %v617 = vsub.s32 32, %v616
      %v618 = vshll.u32 %v609, %v616
      %v619 = vshrl.u32 %v601, %v617
      %v620 = vor.u32 %v618, %v619
      %v621 = vsub.s32 4294967266, %v616
      %v622 = vadd.s32 %v621, 127
      %v623 = vshll.u32 %v622, 23
      %v624 = vor.u32 4788187, %v623
      %v625 = vand.u32 2147483647, %v624
      %v627 = vcvt.s32.f32 %v620
      %v628 = vmul.f32 %v627, %v625
      %v629 = vxor.u32 %v628, 2147483648
      %v630 = vsel %vm509, %v629, %v628
      %v631 = vsub.s32 4, %v607
      %v632 = vsel %vm509, %v631, %v607
      %v633 = vsel %vm508, %v191, %v630
      %v634 = vsel %vm508, 0, %v632
      %v635 = vmul.f32 %v633, %v633
      %v636 = vmul.f32 %v635, -0.001358992
      %v637 = vadd.f32 %v636, 0.041655596
      %v638 = vmul.f32 %v635, %v637
      %v639 = vadd.f32 %v638, -0.4999988
      %v640 = vmul.f32 %v635, %v639
      %v641 = vadd.f32 1.0, %v640
      %v642 = vmul.f32 %v633, %v633
      %v643 = vmul.f32 %v642, -0.00019511016
      %v644 = vadd.f32 %v643, 0.008332121
      %v645 = vmul.f32 %v642, %v644
      %v646 = vadd.f32 %v645, -0.16666654
      %v647 = vmul.f32 %v642, %v646
      %v648 = vadd.f32 %v647, 1.0
      %v649 = vmul.f32 %v648, %v633
      %vm650 = vweird.f32 %v191
      %v651 = vadd.s32 %v634, 3
      %v652 = vand.u32 %v651, 3
      %vm653 = vcmp.lt.s32.totalorder %v652, 2
      %vm654 = vcmp.eq.s32.totalorder %v652, 0
      %v655 = vxor.u32 %v649, 2147483648
      %v656 = vsel %vm654, %v641, %v655
      %vm657 = vcmp.eq.s32.totalorder %v652, 2
      %v658 = vxor.u32 %v641, 2147483648
      %v659 = vsel %vm657, %v658, %v649
      %v660 = vsel %vm653, %v656, %v659
      %v661 = vsel %vm650, nan, %v660
      %v662 = vand.u32 2147483647, %v192
      %vm663 = vcmp.le.f32.partialorder %v662, 0.7853982
      %vm664 = vcmp.lt.s32.totalorder %v192, 0
      %v665 = vand.u32 %v192, 2139095040
      %v666 = vshrl.u32 %v665, 23
      %v667 = vsub.s32 %v666, 127
      %v668 = vand.u32 2147483647, %v192
      %v669 = vand.u32 %v668, 8388607
      %v670 = vor.u32 %v669, 8388608
      %v671 = vsub.s32 0, %v670
      %v672 = vadd.s32 %v667, 1
      %vm673 = vcmp.gt.s32.totalorder %v672, 0
      %v674 = vsel %vm673, %v672, 0
      %v675 = vshrl.u32 %v674, 5
      %v676 = vand.u32 %v674, 31
      %v677 = vsub.s32 32, %v676
      %v678 = vshrl.u32 683565275, %v677
      %v679 = vshll.u32 683565275, %v676
      %v680 = vshrl.u32 2475754826, %v677
      %v681 = vor.u32 %v679, %v680
      %v682 = vshll.u32 2475754826, %v676
      %v683 = vshrl.u32 2131351028, %v677
      %v684 = vor.u32 %v682, %v683
      %v685 = vshll.u32 2131351028, %v676
      %v686 = vshrl.u32 2102212464, %v677
      %v687 = vor.u32 %v685, %v686
      %v688 = vshll.u32 2102212464, %v676
      %v689 = vshrl.u32 920167782, %v677
      %v690 = vor.u32 %v688, %v689
      %v691 = vshll.u32 920167782, %v676
      %v692 = vshrl.u32 1326507024, %v677
      %v693 = vor.u32 %v691, %v692
      %vm694 = vcmp.lt.s32.totalorder %v675, 1
      %vm695 = vcmp.lt.s32.totalorder %v675, 2
      %vm696 = vcmp.lt.s32.totalorder %v675, 3
      %vm697 = vcmp.lt.s32.totalorder %v675, 4
      %v698 = vsel %vm694, %v678, %v681
      %v699 = vsel %vm697, %v687, 2102212464
      %v700 = vsel %vm696, %v684, %v699
      %v701 = vsel %vm695, %v698, %v700
      %v702 = vsel %vm694, %v681, %v684
      %v703 = vsel %vm697, %v690, 920167782
      %v704 = vsel %vm696, %v687, %v703
      %v705 = vsel %vm695, %v702, %v704
      %v706 = vsel %vm694, %v684, %v687
      %v707 = vsel %vm697, %v693, 1326507024
      %v708 = vsel %vm696, %v690, %v707
      %v709 = vsel %vm695, %v706, %v708
      %v710 = vshll.u32 %v670, 8
      %v711 = vand.u32 %v710, 65535
      %v712 = vshrl.u32 %v710, 16
      %v713 = vand.u32 %v709, 65535
      %v714 = vshrl.u32 %v709, 16
      %v715 = vmul.u32 %v711, %v713
      %v716 = vmul.u32 %v711, %v714
      %v717 = vmul.u32 %v712, %v713
      %v718 = vmul.u32 %v712, %v714
      %v719 = vshll.u32 %v716, 16
      %v720 = vshrl.u32 %v716, 16
      %v721 = vshll.u32 %v717, 16
      %v722 = vshrl.u32 %v717, 16
      %vm723 = vc.u32 %v715, %v719
      %v724 = vsel %vm723, 1, 0
      %v725 = vadd.s32 %v715, %v719
      %v726 = vadd.s32 %v718, %v724
      %vm727 = vc.u32 %v725, %v721
      %v728 = vsel %vm727, 1, 0
      %v729 = vadd.s32 %v725, %v721
      %v730 = vadd.s32 %v726, %v728
      %v731 = vadd.s32 %v730, %v720
      %v732 = vadd.s32 %v731, %v722
      %v733 = vand.u32 %v710, 65535
      %v734 = vshrl.u32 %v710, 16
      %v735 = vand.u32 %v705, 65535
      %v736 = vshrl.u32 %v705, 16
      %v737 = vmul.u32 %v733, %v735
      %v738 = vmul.u32 %v733, %v736
      %v739 = vmul.u32 %v734, %v735
      %v740 = vmul.u32 %v734, %v736
      %v741 = vshll.u32 %v738, 16
      %v742 = vshrl.u32 %v738, 16
      %v743 = vshll.u32 %v739, 16
      %v744 = vshrl.u32 %v739, 16
      %vm745 = vc.u32 %v737, %v741
      %v746 = vsel %vm745, 1, 0
      %v747 = vadd.s32 %v737, %v741
      %v748 = vadd.s32 %v740, %v746
      %vm749 = vc.u32 %v747, %v743
      %v750 = vsel %vm749, 1, 0
      %v751 = vadd.s32 %v747, %v743
      %v752 = vadd.s32 %v748, %v750
      %v753 = vadd.s32 %v752, %v742
      %v754 = vadd.s32 %v753, %v744
      %v755 = vmul.u32 %v710, %v701
      %v756 = vadd.s32 %v732, %v751
      %vm757 = vc.u32 %v732, %v751
      %v758 = vadd.s32 %v754, 1
      %v759 = vsel %vm757, %v758, %v754
      %v760 = vadd.s32 %v755, %v759
      %v761 = vadd.s32 %v760, 536870912
      %v762 = vshrl.u32 %v761, 30
      %v763 = vshll.u32 %v762, 30
      %v764 = vsub.s32 %v760, %v763
      %vm765 = vcmp.lt.s32.totalorder %v764, 0
      %v766 = vsub.s32 0, %v764
      %v767 = vsel %vm765, %v766, %v764
      %v768 = vclz %v767
      %v769 = vsub.s32 %v768, 2
      %vm770 = vcmp.gt.s32.totalorder 0, %v769
      %v771 = vsel %vm770, 0, %v769
      %v772 = vsub.s32 32, %v771
      %v773 = vshll.u32 %v764, %v771
      %v774 = vshrl.u32 %v756, %v772
      %v775 = vor.u32 %v773, %v774
      %v776 = vsub.s32 4294967266, %v771
      %v777 = vadd.s32 %v776, 127
      %v778 = vshll.u32 %v777, 23
      %v779 = vor.u32 4788187, %v778
      %v780 = vand.u32 2147483647, %v779
      %v782 = vcvt.s32.f32 %v775
      %v783 = vmul.f32 %v782, %v780
      %v784 = vxor.u32 %v783, 2147483648
      %v785 = vsel %vm664, %v784, %v783
      %v786 = vsub.s32 4, %v762
      %v787 = vsel %vm664, %v786, %v762
      %v788 = vsel %vm663, %v192, %v785
      %v789 = vsel %vm663, 0, %v787
      %v790 = vmul.f32 %v788, %v788
      %v791 = vmul.f32 %v790, -0.001358992
      %v792 = vadd.f32 %v791, 0.041655596
      %v793 = vmul.f32 %v790, %v792
      %v794 = vadd.f32 %v793, -0.4999988
      %v795 = vmul.f32 %v790, %v794
      %v796 = vadd.f32 1.0, %v795
      %v797 = vmul.f32 %v788, %v788
      %v798 = vmul.f32 %v797, -0.00019511016
      %v799 = vadd.f32 %v798, 0.008332121
      %v800 = vmul.f32 %v797, %v799
      %v801 = vadd.f32 %v800, -0.16666654
      %v802 = vmul.f32 %v797, %v801
      %v803 = vadd.f32 %v802, 1.0
      %v804 = vmul.f32 %v803, %v788
      %vm805 = vweird.f32 %v192
      %v806 = vadd.s32 %v789, 3
      %v807 = vand.u32 %v806, 3
      %vm808 = vcmp.lt.s32.totalorder %v807, 2
      %vm809 = vcmp.eq.s32.totalorder %v807, 0
      %v810 = vxor.u32 %v804, 2147483648
      %v811 = vsel %vm809, %v796, %v810
      %vm812 = vcmp.eq.s32.totalorder %v807, 2
      %v813 = vxor.u32 %v796, 2147483648
      %v814 = vsel %vm812, %v813, %v804
      %v815 = vsel %vm808, %v811, %v814
      %v816 = vsel %vm805, nan, %v815
      %v817 = vand.u32 2147483647, %v193
      %vm818 = vcmp.le.f32.partialorder %v817, 0.7853982
      %vm819 = vcmp.lt.s32.totalorder %v193, 0
      %v820 = vand.u32 %v193, 2139095040
      %v821 = vshrl.u32 %v820, 23
      %v822 = vsub.s32 %v821, 127
      %v823 = vand.u32 2147483647, %v193
      %v824 = vand.u32 %v823, 8388607
      %v825 = vor.u32 %v824, 8388608
      %v826 = vsub.s32 0, %v825
      %v827 = vadd.s32 %v822, 1
      %vm828 = vcmp.gt.s32.totalorder %v827, 0
      %v829 = vsel %vm828, %v827, 0
      %v830 = vshrl.u32 %v829, 5
      %v831 = vand.u32 %v829, 31
      %v832 = vsub.s32 32, %v831
      %v833 = vshrl.u32 683565275, %v832
      %v834 = vshll.u32 683565275, %v831
      %v835 = vshrl.u32 2475754826, %v832
      %v836 = vor.u32 %v834, %v835
      %v837 = vshll.u32 2475754826, %v831
      %v838 = vshrl.u32 2131351028, %v832
      %v839 = vor.u32 %v837, %v838
      %v840 = vshll.u32 2131351028, %v831
      %v841 = vshrl.u32 2102212464, %v832
      %v842 = vor.u32 %v840, %v841
      %v843 = vshll.u32 2102212464, %v831
      %v844 = vshrl.u32 920167782, %v832
      %v845 = vor.u32 %v843, %v844
      %v846 = vshll.u32 920167782, %v831
      %v847 = vshrl.u32 1326507024, %v832
      %v848 = vor.u32 %v846, %v847
      %vm849 = vcmp.lt.s32.totalorder %v830, 1
      %vm850 = vcmp.lt.s32.totalorder %v830, 2
      %vm851 = vcmp.lt.s32.totalorder %v830, 3
      %vm852 = vcmp.lt.s32.totalorder %v830, 4
      %v853 = vsel %vm849, %v833, %v836
      %v854 = vsel %vm852, %v842, 2102212464
      %v855 = vsel %vm851, %v839, %v854
      %v856 = vsel %vm850, %v853, %v855
      %v857 = vsel %vm849, %v836, %v839
      %v858 = vsel %vm852, %v845, 920167782
      %v859 = vsel %vm851, %v842, %v858
      %v860 = vsel %vm850, %v857, %v859
      %v861 = vsel %vm849, %v839, %v842
      %v862 = vsel %vm852, %v848, 1326507024
      %v863 = vsel %vm851, %v845, %v862
      %v864 = vsel %vm850, %v861, %v863
      %v865 = vshll.u32 %v825, 8
      %v866 = vand.u32 %v865, 65535
      %v867 = vshrl.u32 %v865, 16
      %v868 = vand.u32 %v864, 65535
      %v869 = vshrl.u32 %v864, 16
      %v870 = vmul.u32 %v866, %v868
      %v871 = vmul.u32 %v866, %v869
      %v872 = vmul.u32 %v867, %v868
      %v873 = vmul.u32 %v867, %v869
      %v874 = vshll.u32 %v871, 16
      %v875 = vshrl.u32 %v871, 16
      %v876 = vshll.u32 %v872, 16
      %v877 = vshrl.u32 %v872, 16
      %vm878 = vc.u32 %v870, %v874
      %v879 = vsel %vm878, 1, 0
      %v880 = vadd.s32 %v870, %v874
      %v881 = vadd.s32 %v873, %v879
      %vm882 = vc.u32 %v880, %v876
      %v883 = vsel %vm882, 1, 0
      %v884 = vadd.s32 %v880, %v876
      %v885 = vadd.s32 %v881, %v883
      %v886 = vadd.s32 %v885, %v875
      %v887 = vadd.s32 %v886, %v877
      %v888 = vand.u32 %v865, 65535
      %v889 = vshrl.u32 %v865, 16
      %v890 = vand.u32 %v860, 65535
      %v891 = vshrl.u32 %v860, 16
      %v892 = vmul.u32 %v888, %v890
      %v893 = vmul.u32 %v888, %v891
      %v894 = vmul.u32 %v889, %v890
      %v895 = vmul.u32 %v889, %v891
      %v896 = vshll.u32 %v893, 16
      %v897 = vshrl.u32 %v893, 16
      %v898 = vshll.u32 %v894, 16
      %v899 = vshrl.u32 %v894, 16
      %vm900 = vc.u32 %v892, %v896
      %v901 = vsel %vm900, 1, 0
      %v902 = vadd.s32 %v892, %v896
      %v903 = vadd.s32 %v895, %v901
      %vm904 = vc.u32 %v902, %v898
      %v905 = vsel %vm904, 1, 0
      %v906 = vadd.s32 %v902, %v898
      %v907 = vadd.s32 %v903, %v905
      %v908 = vadd.s32 %v907, %v897
      %v909 = vadd.s32 %v908, %v899
      %v910 = vmul.u32 %v865, %v856
      %v911 = vadd.s32 %v887, %v906
      %vm912 = vc.u32 %v887, %v906
      %v913 = vadd.s32 %v909, 1
      %v914 = vsel %vm912, %v913, %v909
      %v915 = vadd.s32 %v910, %v914
      %v916 = vadd.s32 %v915, 536870912
      %v917 = vshrl.u32 %v916, 30
      %v918 = vshll.u32 %v917, 30
      %v919 = vsub.s32 %v915, %v918
      %vm920 = vcmp.lt.s32.totalorder %v919, 0
      %v921 = vsub.s32 0, %v919
      %v922 = vsel %vm920, %v921, %v919
      %v923 = vclz %v922
      %v924 = vsub.s32 %v923, 2
      %vm925 = vcmp.gt.s32.totalorder 0, %v924
      %v926 = vsel %vm925, 0, %v924
      %v927 = vsub.s32 32, %v926
      %v928 = vshll.u32 %v919, %v926
      %v929 = vshrl.u32 %v911, %v927
      %v930 = vor.u32 %v928, %v929
      %v931 = vsub.s32 4294967266, %v926
      %v932 = vadd.s32 %v931, 127
      %v933 = vshll.u32 %v932, 23
      %v934 = vor.u32 4788187, %v933
      %v935 = vand.u32 2147483647, %v934
      %v937 = vcvt.s32.f32 %v930
      %v938 = vmul.f32 %v937, %v935
      %v939 = vxor.u32 %v938, 2147483648
      %v940 = vsel %vm819, %v939, %v938
      %v941 = vsub.s32 4, %v917
      %v942 = vsel %vm819, %v941, %v917
      %v943 = vsel %vm818, %v193, %v940
      %v944 = vsel %vm818, 0, %v942
      %v945 = vmul.f32 %v943, %v943
      %v946 = vmul.f32 %v945, -0.001358992
      %v947 = vadd.f32 %v946, 0.041655596
      %v948 = vmul.f32 %v945, %v947
      %v949 = vadd.f32 %v948, -0.4999988
      %v950 = vmul.f32 %v945, %v949
      %v951 = vadd.f32 1.0, %v950
      %v952 = vmul.f32 %v943, %v943
      %v953 = vmul.f32 %v952, -0.00019511016
      %v954 = vadd.f32 %v953, 0.008332121
      %v955 = vmul.f32 %v952, %v954
      %v956 = vadd.f32 %v955, -0.16666654
      %v957 = vmul.f32 %v952, %v956
      %v958 = vadd.f32 %v957, 1.0
      %v959 = vmul.f32 %v958, %v943
      %vm960 = vweird.f32 %v193
      %v961 = vadd.s32 %v944, 3
      %v962 = vand.u32 %v961, 3
      %vm963 = vcmp.lt.s32.totalorder %v962, 2
      %vm964 = vcmp.eq.s32.totalorder %v962, 0
      %v965 = vxor.u32 %v959, 2147483648
      %v966 = vsel %vm964, %v951, %v965
      %vm967 = vcmp.eq.s32.totalorder %v962, 2
      %v968 = vxor.u32 %v951, 2147483648
      %v969 = vsel %vm967, %v968, %v959
      %v970 = vsel %vm963, %v966, %v969
      %v971 = vsel %vm960, nan, %v970
      %v972 = vand.u32 2147483647, %v194
      %vm973 = vcmp.le.f32.partialorder %v972, 0.7853982
      %vm974 = vcmp.lt.s32.totalorder %v194, 0
      %v975 = vand.u32 %v194, 2139095040
      %v976 = vshrl.u32 %v975, 23
      %v977 = vsub.s32 %v976, 127
      %v978 = vand.u32 2147483647, %v194
      %v979 = vand.u32 %v978, 8388607
      %v980 = vor.u32 %v979, 8388608
      %v981 = vsub.s32 0, %v980
      %v982 = vadd.s32 %v977, 1
      %vm983 = vcmp.gt.s32.totalorder %v982, 0
      %v984 = vsel %vm983, %v982, 0
      %v985 = vshrl.u32 %v984, 5
      %v986 = vand.u32 %v984, 31
      %v987 = vsub.s32 32, %v986
      %v988 = vshrl.u32 683565275, %v987
      %v989 = vshll.u32 683565275, %v986
      %v990 = vshrl.u32 2475754826, %v987
      %v991 = vor.u32 %v989, %v990
      %v992 = vshll.u32 2475754826, %v986
      %v993 = vshrl.u32 2131351028, %v987
      %v994 = vor.u32 %v992, %v993
      %v995 = vshll.u32 2131351028, %v986
      %v996 = vshrl.u32 2102212464, %v987
      %v997 = vor.u32 %v995, %v996
      %v998 = vshll.u32 2102212464, %v986
      %v999 = vshrl.u32 920167782, %v987
      %v1000 = vor.u32 %v998, %v999
      %v1001 = vshll.u32 920167782, %v986
      %v1002 = vshrl.u32 1326507024, %v987
      %v1003 = vor.u32 %v1001, %v1002
      %vm1004 = vcmp.lt.s32.totalorder %v985, 1
      %vm1005 = vcmp.lt.s32.totalorder %v985, 2
      %vm1006 = vcmp.lt.s32.totalorder %v985, 3
      %vm1007 = vcmp.lt.s32.totalorder %v985, 4
      %v1008 = vsel %vm1004, %v988, %v991
      %v1009 = vsel %vm1007, %v997, 2102212464
      %v1010 = vsel %vm1006, %v994, %v1009
      %v1011 = vsel %vm1005, %v1008, %v1010
      %v1012 = vsel %vm1004, %v991, %v994
      %v1013 = vsel %vm1007, %v1000, 920167782
      %v1014 = vsel %vm1006, %v997, %v1013
      %v1015 = vsel %vm1005, %v1012, %v1014
      %v1016 = vsel %vm1004, %v994, %v997
      %v1017 = vsel %vm1007, %v1003, 1326507024
      %v1018 = vsel %vm1006, %v1000, %v1017
      %v1019 = vsel %vm1005, %v1016, %v1018
      %v1020 = vshll.u32 %v980, 8
      %v1021 = vand.u32 %v1020, 65535
      %v1022 = vshrl.u32 %v1020, 16
      %v1023 = vand.u32 %v1019, 65535
      %v1024 = vshrl.u32 %v1019, 16
      %v1025 = vmul.u32 %v1021, %v1023
      %v1026 = vmul.u32 %v1021, %v1024
      %v1027 = vmul.u32 %v1022, %v1023
      %v1028 = vmul.u32 %v1022, %v1024
      %v1029 = vshll.u32 %v1026, 16
      %v1030 = vshrl.u32 %v1026, 16
      %v1031 = vshll.u32 %v1027, 16
      %v1032 = vshrl.u32 %v1027, 16
      %vm1033 = vc.u32 %v1025, %v1029
      %v1034 = vsel %vm1033, 1, 0
      %v1035 = vadd.s32 %v1025, %v1029
      %v1036 = vadd.s32 %v1028, %v1034
      %vm1037 = vc.u32 %v1035, %v1031
      %v1038 = vsel %vm1037, 1, 0
      %v1039 = vadd.s32 %v1035, %v1031
      %v1040 = vadd.s32 %v1036, %v1038
      %v1041 = vadd.s32 %v1040, %v1030
      %v1042 = vadd.s32 %v1041, %v1032
      %v1043 = vand.u32 %v1020, 65535
      %v1044 = vshrl.u32 %v1020, 16
      %v1045 = vand.u32 %v1015, 65535
      %v1046 = vshrl.u32 %v1015, 16
      %v1047 = vmul.u32 %v1043, %v1045
      %v1048 = vmul.u32 %v1043, %v1046
      %v1049 = vmul.u32 %v1044, %v1045
      %v1050 = vmul.u32 %v1044, %v1046
      %v1051 = vshll.u32 %v1048, 16
      %v1052 = vshrl.u32 %v1048, 16
      %v1053 = vshll.u32 %v1049, 16
      %v1054 = vshrl.u32 %v1049, 16
      %vm1055 = vc.u32 %v1047, %v1051
      %v1056 = vsel %vm1055, 1, 0
      %v1057 = vadd.s32 %v1047, %v1051
      %v1058 = vadd.s32 %v1050, %v1056
      %vm1059 = vc.u32 %v1057, %v1053
      %v1060 = vsel %vm1059, 1, 0
      %v1061 = vadd.s32 %v1057, %v1053
      %v1062 = vadd.s32 %v1058, %v1060
      %v1063 = vadd.s32 %v1062, %v1052
      %v1064 = vadd.s32 %v1063, %v1054
      %v1065 = vmul.u32 %v1020, %v1011
      %v1066 = vadd.s32 %v1042, %v1061
      %vm1067 = vc.u32 %v1042, %v1061
      %v1068 = vadd.s32 %v1064, 1
      %v1069 = vsel %vm1067, %v1068, %v1064
      %v1070 = vadd.s32 %v1065, %v1069
      %v1071 = vadd.s32 %v1070, 536870912
      %v1072 = vshrl.u32 %v1071, 30
      %v1073 = vshll.u32 %v1072, 30
      %v1074 = vsub.s32 %v1070, %v1073
      %vm1075 = vcmp.lt.s32.totalorder %v1074, 0
      %v1076 = vsub.s32 0, %v1074
      %v1077 = vsel %vm1075, %v1076, %v1074
      %v1078 = vclz %v1077
      %v1079 = vsub.s32 %v1078, 2
      %vm1080 = vcmp.gt.s32.totalorder 0, %v1079
      %v1081 = vsel %vm1080, 0, %v1079
      %v1082 = vsub.s32 32, %v1081
      %v1083 = vshll.u32 %v1074, %v1081
      %v1084 = vshrl.u32 %v1066, %v1082
      %v1085 = vor.u32 %v1083, %v1084
      %v1086 = vsub.s32 4294967266, %v1081
      %v1087 = vadd.s32 %v1086, 127
      %v1088 = vshll.u32 %v1087, 23
      %v1089 = vor.u32 4788187, %v1088
      %v1090 = vand.u32 2147483647, %v1089
      %v1092 = vcvt.s32.f32 %v1085
      %v1093 = vmul.f32 %v1092, %v1090
      %v1094 = vxor.u32 %v1093, 2147483648
      %v1095 = vsel %vm974, %v1094, %v1093
      %v1096 = vsub.s32 4, %v1072
      %v1097 = vsel %vm974, %v1096, %v1072
      %v1098 = vsel %vm973, %v194, %v1095
      %v1099 = vsel %vm973, 0, %v1097
      %v1100 = vmul.f32 %v1098, %v1098
      %v1101 = vmul.f32 %v1100, -0.001358992
      %v1102 = vadd.f32 %v1101, 0.041655596
      %v1103 = vmul.f32 %v1100, %v1102
      %v1104 = vadd.f32 %v1103, -0.4999988
      %v1105 = vmul.f32 %v1100, %v1104
      %v1106 = vadd.f32 1.0, %v1105
      %v1107 = vmul.f32 %v1098, %v1098
      %v1108 = vmul.f32 %v1107, -0.00019511016
      %v1109 = vadd.f32 %v1108, 0.008332121
      %v1110 = vmul.f32 %v1107, %v1109
      %v1111 = vadd.f32 %v1110, -0.16666654
      %v1112 = vmul.f32 %v1107, %v1111
      %v1113 = vadd.f32 %v1112, 1.0
      %v1114 = vmul.f32 %v1113, %v1098
      %vm1115 = vweird.f32 %v194
      %v1116 = vadd.s32 %v1099, 3
      %v1117 = vand.u32 %v1116, 3
      %vm1118 = vcmp.lt.s32.totalorder %v1117, 2
      %vm1119 = vcmp.eq.s32.totalorder %v1117, 0
      %v1120 = vxor.u32 %v1114, 2147483648
      %v1121 = vsel %vm1119, %v1106, %v1120
      %vm1122 = vcmp.eq.s32.totalorder %v1117, 2
      %v1123 = vxor.u32 %v1106, 2147483648
      %v1124 = vsel %vm1122, %v1123, %v1114
      %v1125 = vsel %vm1118, %v1121, %v1124
      %v1126 = vsel %vm1115, nan, %v1125
      %v1127 = vand.u32 2147483647, %v195
      %vm1128 = vcmp.le.f32.partialorder %v1127, 0.7853982
      %vm1129 = vcmp.lt.s32.totalorder %v195, 0
      %v1130 = vand.u32 %v195, 2139095040
      %v1131 = vshrl.u32 %v1130, 23
      %v1132 = vsub.s32 %v1131, 127
      %v1133 = vand.u32 2147483647, %v195
      %v1134 = vand.u32 %v1133, 8388607
      %v1135 = vor.u32 %v1134, 8388608
      %v1136 = vsub.s32 0, %v1135
      %v1137 = vadd.s32 %v1132, 1
      %vm1138 = vcmp.gt.s32.totalorder %v1137, 0
      %v1139 = vsel %vm1138, %v1137, 0
      %v1140 = vshrl.u32 %v1139, 5
      %v1141 = vand.u32 %v1139, 31
      %v1142 = vsub.s32 32, %v1141
      %v1143 = vshrl.u32 683565275, %v1142
      %v1144 = vshll.u32 683565275, %v1141
      %v1145 = vshrl.u32 2475754826, %v1142
      %v1146 = vor.u32 %v1144, %v1145
      %v1147 = vshll.u32 2475754826, %v1141
      %v1148 = vshrl.u32 2131351028, %v1142
      %v1149 = vor.u32 %v1147, %v1148
      %v1150 = vshll.u32 2131351028, %v1141
      %v1151 = vshrl.u32 2102212464, %v1142
      %v1152 = vor.u32 %v1150, %v1151
      %v1153 = vshll.u32 2102212464, %v1141
      %v1154 = vshrl.u32 920167782, %v1142
      %v1155 = vor.u32 %v1153, %v1154
      %v1156 = vshll.u32 920167782, %v1141
      %v1157 = vshrl.u32 1326507024, %v1142
      %v1158 = vor.u32 %v1156, %v1157
      %vm1159 = vcmp.lt.s32.totalorder %v1140, 1
      %vm1160 = vcmp.lt.s32.totalorder %v1140, 2
      %vm1161 = vcmp.lt.s32.totalorder %v1140, 3
      %vm1162 = vcmp.lt.s32.totalorder %v1140, 4
      %v1163 = vsel %vm1159, %v1143, %v1146
      %v1164 = vsel %vm1162, %v1152, 2102212464
      %v1165 = vsel %vm1161, %v1149, %v1164
      %v1166 = vsel %vm1160, %v1163, %v1165
      %v1167 = vsel %vm1159, %v1146, %v1149
      %v1168 = vsel %vm1162, %v1155, 920167782
      %v1169 = vsel %vm1161, %v1152, %v1168
      %v1170 = vsel %vm1160, %v1167, %v1169
      %v1171 = vsel %vm1159, %v1149, %v1152
      %v1172 = vsel %vm1162, %v1158, 1326507024
      %v1173 = vsel %vm1161, %v1155, %v1172
      %v1174 = vsel %vm1160, %v1171, %v1173
      %v1175 = vshll.u32 %v1135, 8
      %v1176 = vand.u32 %v1175, 65535
      %v1177 = vshrl.u32 %v1175, 16
      %v1178 = vand.u32 %v1174, 65535
      %v1179 = vshrl.u32 %v1174, 16
      %v1180 = vmul.u32 %v1176, %v1178
      %v1181 = vmul.u32 %v1176, %v1179
      %v1182 = vmul.u32 %v1177, %v1178
      %v1183 = vmul.u32 %v1177, %v1179
      %v1184 = vshll.u32 %v1181, 16
      %v1185 = vshrl.u32 %v1181, 16
      %v1186 = vshll.u32 %v1182, 16
      %v1187 = vshrl.u32 %v1182, 16
      %vm1188 = vc.u32 %v1180, %v1184
      %v1189 = vsel %vm1188, 1, 0
      %v1190 = vadd.s32 %v1180, %v1184
      %v1191 = vadd.s32 %v1183, %v1189
      %vm1192 = vc.u32 %v1190, %v1186
      %v1193 = vsel %vm1192, 1, 0
      %v1194 = vadd.s32 %v1190, %v1186
      %v1195 = vadd.s32 %v1191, %v1193
      %v1196 = vadd.s32 %v1195, %v1185
      %v1197 = vadd.s32 %v1196, %v1187
      %v1198 = vand.u32 %v1175, 65535
      %v1199 = vshrl.u32 %v1175, 16
      %v1200 = vand.u32 %v1170, 65535
      %v1201 = vshrl.u32 %v1170, 16
      %v1202 = vmul.u32 %v1198, %v1200
      %v1203 = vmul.u32 %v1198, %v1201
      %v1204 = vmul.u32 %v1199, %v1200
      %v1205 = vmul.u32 %v1199, %v1201
      %v1206 = vshll.u32 %v1203, 16
      %v1207 = vshrl.u32 %v1203, 16
      %v1208 = vshll.u32 %v1204, 16
      %v1209 = vshrl.u32 %v1204, 16
      %vm1210 = vc.u32 %v1202, %v1206
      %v1211 = vsel %vm1210, 1, 0
      %v1212 = vadd.s32 %v1202, %v1206
      %v1213 = vadd.s32 %v1205, %v1211
      %vm1214 = vc.u32 %v1212, %v1208
      %v1215 = vsel %vm1214, 1, 0
      %v1216 = vadd.s32 %v1212, %v1208
      %v1217 = vadd.s32 %v1213, %v1215
      %v1218 = vadd.s32 %v1217, %v1207
      %v1219 = vadd.s32 %v1218, %v1209
      %v1220 = vmul.u32 %v1175, %v1166
      %v1221 = vadd.s32 %v1197, %v1216
      %vm1222 = vc.u32 %v1197, %v1216
      %v1223 = vadd.s32 %v1219, 1
      %v1224 = vsel %vm1222, %v1223, %v1219
      %v1225 = vadd.s32 %v1220, %v1224
      %v1226 = vadd.s32 %v1225, 536870912
      %v1227 = vshrl.u32 %v1226, 30
      %v1228 = vshll.u32 %v1227, 30
      %v1229 = vsub.s32 %v1225, %v1228
      %vm1230 = vcmp.lt.s32.totalorder %v1229, 0
      %v1231 = vsub.s32 0, %v1229
      %v1232 = vsel %vm1230, %v1231, %v1229
      %v1233 = vclz %v1232
      %v1234 = vsub.s32 %v1233, 2
      %vm1235 = vcmp.gt.s32.totalorder 0, %v1234
      %v1236 = vsel %vm1235, 0, %v1234
      %v1237 = vsub.s32 32, %v1236
      %v1238 = vshll.u32 %v1229, %v1236
      %v1239 = vshrl.u32 %v1221, %v1237
      %v1240 = vor.u32 %v1238, %v1239
      %v1241 = vsub.s32 4294967266, %v1236
      %v1242 = vadd.s32 %v1241, 127
      %v1243 = vshll.u32 %v1242, 23
      %v1244 = vor.u32 4788187, %v1243
      %v1245 = vand.u32 2147483647, %v1244
      %v1247 = vcvt.s32.f32 %v1240
      %v1248 = vmul.f32 %v1247, %v1245
      %v1249 = vxor.u32 %v1248, 2147483648
      %v1250 = vsel %vm1129, %v1249, %v1248
      %v1251 = vsub.s32 4, %v1227
      %v1252 = vsel %vm1129, %v1251, %v1227
      %v1253 = vsel %vm1128, %v195, %v1250
      %v1254 = vsel %vm1128, 0, %v1252
      %v1255 = vmul.f32 %v1253, %v1253
      %v1256 = vmul.f32 %v1255, -0.001358992
      %v1257 = vadd.f32 %v1256, 0.041655596
      %v1258 = vmul.f32 %v1255, %v1257
      %v1259 = vadd.f32 %v1258, -0.4999988
      %v1260 = vmul.f32 %v1255, %v1259
      %v1261 = vadd.f32 1.0, %v1260
      %v1262 = vmul.f32 %v1253, %v1253
      %v1263 = vmul.f32 %v1262, -0.00019511016
      %v1264 = vadd.f32 %v1263, 0.008332121
      %v1265 = vmul.f32 %v1262, %v1264
      %v1266 = vadd.f32 %v1265, -0.16666654
      %v1267 = vmul.f32 %v1262, %v1266
      %v1268 = vadd.f32 %v1267, 1.0
      %v1269 = vmul.f32 %v1268, %v1253
      %vm1270 = vweird.f32 %v195
      %v1271 = vadd.s32 %v1254, 3
      %v1272 = vand.u32 %v1271, 3
      %vm1273 = vcmp.lt.s32.totalorder %v1272, 2
      %vm1274 = vcmp.eq.s32.totalorder %v1272, 0
      %v1275 = vxor.u32 %v1269, 2147483648
      %v1276 = vsel %vm1274, %v1261, %v1275
      %vm1277 = vcmp.eq.s32.totalorder %v1272, 2
      %v1278 = vxor.u32 %v1261, 2147483648
      %v1279 = vsel %vm1277, %v1278, %v1269
      %v1280 = vsel %vm1273, %v1276, %v1279
      %v1281 = vsel %vm1270, nan, %v1280
      %v1282 = vand.u32 2147483647, %v196
      %vm1283 = vcmp.le.f32.partialorder %v1282, 0.7853982
      %vm1284 = vcmp.lt.s32.totalorder %v196, 0
      %v1285 = vand.u32 %v196, 2139095040
      %v1286 = vshrl.u32 %v1285, 23
      %v1287 = vsub.s32 %v1286, 127
      %v1288 = vand.u32 2147483647, %v196
      %v1289 = vand.u32 %v1288, 8388607
      %v1290 = vor.u32 %v1289, 8388608
      %v1291 = vsub.s32 0, %v1290
      %v1292 = vadd.s32 %v1287, 1
      %vm1293 = vcmp.gt.s32.totalorder %v1292, 0
      %v1294 = vsel %vm1293, %v1292, 0
      %v1295 = vshrl.u32 %v1294, 5
      %v1296 = vand.u32 %v1294, 31
      %v1297 = vsub.s32 32, %v1296
      %v1298 = vshrl.u32 683565275, %v1297
      %v1299 = vshll.u32 683565275, %v1296
      %v1300 = vshrl.u32 2475754826, %v1297
      %v1301 = vor.u32 %v1299, %v1300
      %v1302 = vshll.u32 2475754826, %v1296
      %v1303 = vshrl.u32 2131351028, %v1297
      %v1304 = vor.u32 %v1302, %v1303
      %v1305 = vshll.u32 2131351028, %v1296
      %v1306 = vshrl.u32 2102212464, %v1297
      %v1307 = vor.u32 %v1305, %v1306
      %v1308 = vshll.u32 2102212464, %v1296
      %v1309 = vshrl.u32 920167782, %v1297
      %v1310 = vor.u32 %v1308, %v1309
      %v1311 = vshll.u32 920167782, %v1296
      %v1312 = vshrl.u32 1326507024, %v1297
      %v1313 = vor.u32 %v1311, %v1312
      %vm1314 = vcmp.lt.s32.totalorder %v1295, 1
      %vm1315 = vcmp.lt.s32.totalorder %v1295, 2
      %vm1316 = vcmp.lt.s32.totalorder %v1295, 3
      %vm1317 = vcmp.lt.s32.totalorder %v1295, 4
      %v1318 = vsel %vm1314, %v1298, %v1301
      %v1319 = vsel %vm1317, %v1307, 2102212464
      %v1320 = vsel %vm1316, %v1304, %v1319
      %v1321 = vsel %vm1315, %v1318, %v1320
      %v1322 = vsel %vm1314, %v1301, %v1304
      %v1323 = vsel %vm1317, %v1310, 920167782
      %v1324 = vsel %vm1316, %v1307, %v1323
      %v1325 = vsel %vm1315, %v1322, %v1324
      %v1326 = vsel %vm1314, %v1304, %v1307
      %v1327 = vsel %vm1317, %v1313, 1326507024
      %v1328 = vsel %vm1316, %v1310, %v1327
      %v1329 = vsel %vm1315, %v1326, %v1328
      %v1330 = vshll.u32 %v1290, 8
      %v1331 = vand.u32 %v1330, 65535
      %v1332 = vshrl.u32 %v1330, 16
      %v1333 = vand.u32 %v1329, 65535
      %v1334 = vshrl.u32 %v1329, 16
      %v1335 = vmul.u32 %v1331, %v1333
      %v1336 = vmul.u32 %v1331, %v1334
      %v1337 = vmul.u32 %v1332, %v1333
      %v1338 = vmul.u32 %v1332, %v1334
      %v1339 = vshll.u32 %v1336, 16
      %v1340 = vshrl.u32 %v1336, 16
      %v1341 = vshll.u32 %v1337, 16
      %v1342 = vshrl.u32 %v1337, 16
      %vm1343 = vc.u32 %v1335, %v1339
      %v1344 = vsel %vm1343, 1, 0
      %v1345 = vadd.s32 %v1335, %v1339
      %v1346 = vadd.s32 %v1338, %v1344
      %vm1347 = vc.u32 %v1345, %v1341
      %v1348 = vsel %vm1347, 1, 0
      %v1349 = vadd.s32 %v1345, %v1341
      %v1350 = vadd.s32 %v1346, %v1348
      %v1351 = vadd.s32 %v1350, %v1340
      %v1352 = vadd.s32 %v1351, %v1342
      %v1353 = vand.u32 %v1330, 65535
      %v1354 = vshrl.u32 %v1330, 16
      %v1355 = vand.u32 %v1325, 65535
      %v1356 = vshrl.u32 %v1325, 16
      %v1357 = vmul.u32 %v1353, %v1355
      %v1358 = vmul.u32 %v1353, %v1356
      %v1359 = vmul.u32 %v1354, %v1355
      %v1360 = vmul.u32 %v1354, %v1356
      %v1361 = vshll.u32 %v1358, 16
      %v1362 = vshrl.u32 %v1358, 16
      %v1363 = vshll.u32 %v1359, 16
      %v1364 = vshrl.u32 %v1359, 16
      %vm1365 = vc.u32 %v1357, %v1361
      %v1366 = vsel %vm1365, 1, 0
      %v1367 = vadd.s32 %v1357, %v1361
      %v1368 = vadd.s32 %v1360, %v1366
      %vm1369 = vc.u32 %v1367, %v1363
      %v1370 = vsel %vm1369, 1, 0
      %v1371 = vadd.s32 %v1367, %v1363
      %v1372 = vadd.s32 %v1368, %v1370
      %v1373 = vadd.s32 %v1372, %v1362
      %v1374 = vadd.s32 %v1373, %v1364
      %v1375 = vmul.u32 %v1330, %v1321
      %v1376 = vadd.s32 %v1352, %v1371
      %vm1377 = vc.u32 %v1352, %v1371
      %v1378 = vadd.s32 %v1374, 1
      %v1379 = vsel %vm1377, %v1378, %v1374
      %v1380 = vadd.s32 %v1375, %v1379
      %v1381 = vadd.s32 %v1380, 536870912
      %v1382 = vshrl.u32 %v1381, 30
      %v1383 = vshll.u32 %v1382, 30
      %v1384 = vsub.s32 %v1380, %v1383
      %vm1385 = vcmp.lt.s32.totalorder %v1384, 0
      %v1386 = vsub.s32 0, %v1384
      %v1387 = vsel %vm1385, %v1386, %v1384
      %v1388 = vclz %v1387
      %v1389 = vsub.s32 %v1388, 2
      %vm1390 = vcmp.gt.s32.totalorder 0, %v1389
      %v1391 = vsel %vm1390, 0, %v1389
      %v1392 = vsub.s32 32, %v1391
      %v1393 = vshll.u32 %v1384, %v1391
      %v1394 = vshrl.u32 %v1376, %v1392
      %v1395 = vor.u32 %v1393, %v1394
      %v1396 = vsub.s32 4294967266, %v1391
      %v1397 = vadd.s32 %v1396, 127
      %v1398 = vshll.u32 %v1397, 23
      %v1399 = vor.u32 4788187, %v1398
      %v1400 = vand.u32 2147483647, %v1399
      %v1402 = vcvt.s32.f32 %v1395
      %v1403 = vmul.f32 %v1402, %v1400
      %v1404 = vxor.u32 %v1403, 2147483648
      %v1405 = vsel %vm1284, %v1404, %v1403
      %v1406 = vsub.s32 4, %v1382
      %v1407 = vsel %vm1284, %v1406, %v1382
      %v1408 = vsel %vm1283, %v196, %v1405
      %v1409 = vsel %vm1283, 0, %v1407
      %v1410 = vmul.f32 %v1408, %v1408
      %v1411 = vmul.f32 %v1410, -0.001358992
      %v1412 = vadd.f32 %v1411, 0.041655596
      %v1413 = vmul.f32 %v1410, %v1412
      %v1414 = vadd.f32 %v1413, -0.4999988
      %v1415 = vmul.f32 %v1410, %v1414
      %v1416 = vadd.f32 1.0, %v1415
      %v1417 = vmul.f32 %v1408, %v1408
      %v1418 = vmul.f32 %v1417, -0.00019511016
      %v1419 = vadd.f32 %v1418, 0.008332121
      %v1420 = vmul.f32 %v1417, %v1419
      %v1421 = vadd.f32 %v1420, -0.16666654
      %v1422 = vmul.f32 %v1417, %v1421
      %v1423 = vadd.f32 %v1422, 1.0
      %v1424 = vmul.f32 %v1423, %v1408
      %vm1425 = vweird.f32 %v196
      %v1426 = vadd.s32 %v1409, 3
      %v1427 = vand.u32 %v1426, 3
      %vm1428 = vcmp.lt.s32.totalorder %v1427, 2
      %vm1429 = vcmp.eq.s32.totalorder %v1427, 0
      %v1430 = vxor.u32 %v1424, 2147483648
      %v1431 = vsel %vm1429, %v1416, %v1430
      %vm1432 = vcmp.eq.s32.totalorder %v1427, 2
      %v1433 = vxor.u32 %v1416, 2147483648
      %v1434 = vsel %vm1432, %v1433, %v1424
      %v1435 = vsel %vm1428, %v1431, %v1434
      %v1436 = vsel %vm1425, nan, %v1435
      %vm1437 = vcmask 130048
      %1438 = vst.msk [vmem:[%s177] sm:$0xff] %vm1437, %v351
      %1439 = vst.msk [vmem:[%s177 + $0x8] sm:$0xff] %vm1437, %v506
      %1440 = vst.msk [vmem:[%s177 + $0x10] sm:$0xff] %vm1437, %v661
      %1441 = vst.msk [vmem:[%s177 + $0x18] sm:$0xff] %vm1437, %v816
      %1442 = vst.msk [vmem:[%s177 + $0x20] sm:$0xff] %vm1437, %v971
      %1443 = vst.msk [vmem:[%s177 + $0x28] sm:$0xff] %vm1437, %v1126
      %1444 = vst.msk [vmem:[%s177 + $0x30] sm:$0xff] %vm1437, %v1281
      %1445 = vst.msk [vmem:[%s177 + $0x38] sm:$0xff] %vm1437, %v1436
      %s1446 = smul.u32 8, %s18
      %p1447 = scmp.lt.s32.totalorder %s1446, 15
      %s1448 = scalar_select %p1447, %s1446, 15
      %p1449 = scmp.lt.s32.totalorder %s19, 0
      %s1450 = scalar_select %p1449, %s19, 0
      %s1451 = sadd.s32 %s1450, %s1448
      %s1452 = smul.addr %s1451, 8
      %s1453 = scalar_lea.vmem %s2, %s1452
      // Predicated region
      $region29: #{tpu_custom_call.1} parent=27 // pred_check
        %p1454 = pneg %p95
      $region30: #{tpu_custom_call.1} parent=27 // pred_check_branch
        %1456 = sbr.rel (%p1454) target = $region32
      $region31: #{tpu_custom_call.1} parent=27 // pred_region
        %s1457 = smul.u32 8, %s18
      $region32: #{tpu_custom_call.1} parent=27 // pred_fallthru
        _
    $region28: #{tpu_custom_call.1} parent=5 // pred_fallthru
      _
    %p1458 = scmp.le.s32.totalorder 2, %s9
    // Predicated region
    $region33: #{tpu_custom_call.1} parent=5 // pred_check
      %p1459 = pneg %p1458
    $region34: #{tpu_custom_call.1} parent=5 // pred_check_branch
      %1461 = sbr.rel (%p1459) target = $region36
    $region35: #{tpu_custom_call.1} parent=5 // pred_region
      %s1462 = ssub.s32 %s9, 2
      // Predicated region
      $region37: #{tpu_custom_call.1} parent=35 // pred_check
        %p1463 = pneg %p101
      $region38: #{tpu_custom_call.1} parent=35 // pred_check_branch
        %1465 = sbr.rel (%p1463) target = $region40
      $region39: #{tpu_custom_call.1} parent=35 // pred_region
        %s1466 = smul.u32 8, %s20
        %p1467 = scmp.lt.s32.totalorder %s1466, 15
        %s1468 = scalar_select %p1467, %s1466, 15
        %p1469 = scmp.lt.s32.totalorder %s21, 0
        %s1470 = scalar_select %p1469, %s21, 0
        %s1471 = sadd.s32 %s1470, %s1468
        %s1472 = smul.addr %s1471, 8
        %s1473 = scalar_lea.vmem %s2, %s1472
      $region40: #{tpu_custom_call.1} parent=35 // pred_fallthru
        _
    $region36: #{tpu_custom_call.1} parent=5 // pred_fallthru
      _
  $region6: #{tpu_custom_call.1} parent=0 // loop_footer
    %s13 = sadd.s32 1, %s9
  $region7: #{tpu_custom_call.1} parent=0 // loop_footer_branch
    %8 = sbr.rel target = $region3
  $region8: #{tpu_custom_call.1} parent=0 // loop_exit
    _

</llo_original>
